<compile_context>
chip_gen: v5e
topology: v5e:2x2
jax: 0.10.0
libtpu: 0.0.40
codegen_flags: <defaults>
</compile_context>

<pallas_src>
import functools

import jax
import jax.numpy as jnp
from jax.experimental import pallas as pl
from jax.experimental.pallas import tpu as pltpu


def _round_up(n: int, m: int) -> int:
    return (n + m - 1) // m * m


def _physical_vmem_bytes() -> int:
    try:
        return int(pltpu.get_tpu_info().vmem_capacity_bytes)
    except Exception:
        return 64 * 1024 * 1024  # v7x-safe fallback


def _plan_tiles(M, Kp, Np, Nc, x_bytes, w_bytes, out_bytes):
    """Pick (tm, tk) and a VMEM limit.

    Preference order:
      1. collapse the K grid axis (tk = Kp) with a reasonably large tm, so the
         packed-weight block is DMA'd from HBM exactly once;
      2. otherwise the largest x tile that fits the budget (tm first).
    """
    phys = _physical_vmem_bytes()
    budget = int(phys * 0.70)  # leave pipeline / compiler headroom

    m_ceiling = _round_up(max(M, 1), 8)

    def usage(tm, tk):
        return (2 * tm * tk * x_bytes            # double-buffered x tiles
                + 2 * tk * Nc * w_bytes          # double-buffered packed weights
                + 2 * 8 * Nc * 4                 # bias tiles (sublane-padded)
                + 2 * 2 * tm * Np * out_bytes    # two double-buffered outputs
                + tm * Nc * 4)                   # f32 accumulator scratch

    tm_opts = [t for t in (1024, 512, 256, 128, 64, 32, 16, 8) if t <= m_ceiling] or [8]
    tk_opts = [Kp] + [t for t in (4096, 2048, 1024, 512, 256, 128)
                      if t < Kp and Kp % t == 0]

    tm_floor = min(256, m_ceiling)
    tm_, tk_ = None, None

    # Pass 1: prefer collapsing K (biggest tk) with tm >= tm_floor.
    for tk in tk_opts:
        for tm in tm_opts:
            if tm < tm_floor:
                break
            if usage(tm, tk) <= budget:
                tm_, tk_ = tm, tk
                break
        if tm_ is not None:
            break

    # Pass 2: biggest x tile (tm first) that fits.
    if tm_ is None:
        for tm in tm_opts:
            for tk in tk_opts:
                if usage(tm, tk) <= budget:
                    tm_, tk_ = tm, tk
                    break
            if tm_ is not None:
                break

    if tm_ is None:  # pathological (huge latent_dim): smallest tiles.
        tm_, tk_ = tm_opts[-1], tk_opts[-1]

    # Megacore (v7x) hint: with a collapsed K axis, splitting M into >= 2
    # blocks adds no HBM traffic but lets both TensorCores share the
    # "parallel" M axis.  Near-free on 1-TC chips; skipped for tiny M.
    if tk_ == Kp and M > 8 and _round_up(M, tm_) // tm_ == 1:
        tm_split = _round_up(-(-M // 2), 8)
        if tm_split < tm_:
            tm_ = tm_split

    vmem_limit = int(min(max(usage(tm_, tk_) * 5 // 4 + (1 << 20),
                             32 * 1024 * 1024),
                         phys * 85 // 100))
    return tm_, tk_, vmem_limit


def _duplex_neck_kernel(np_half, x_ref, w_ref, b_ref, mu_ref, lv_ref, acc_ref):
    """One (tm, tk) step of the fused dual-head matmul.

    w_ref is the packed [W_mu^T | W_log_var^T] tile of shape (tk, 2*Np);
    acc_ref is a single (tm, 2*Np) f32 accumulator split at the last K step.
    """
    k = pl.program_id(1)

    @pl.when(k == 0)
    def _():
        # Initialise the accumulator with the broadcast bias so the finalize
        # is just a split + cast.
        acc_ref[...] = jnp.broadcast_to(b_ref[...], acc_ref.shape).astype(jnp.float32)

    acc_ref[...] += jnp.dot(x_ref[...], w_ref[...],
                            preferred_element_type=jnp.float32)

    @pl.when(k == pl.num_programs(1) - 1)
    def _():
        acc = acc_ref[...]
        mu_ref[...] = acc[:, :np_half].astype(mu_ref.dtype)
        lv_ref[...] = acc[:, np_half:].astype(lv_ref.dtype)


def prepare_duplex_neck_params(w_mu, b_mu, w_lv, b_lv, compute_dtype=None):
    """One-time parameter layout (hoist out of the forward path).

    Transposes each weight to (in_dim, latent_dim), pads to (8,128)-aligned
    tiles and packs the two heads side-by-side along N.  Optionally casts the
    weights to a bf16 MXU compute dtype (bias stays f32).
    """
    latent_dim, in_dim = w_mu.shape
    Kp = _round_up(in_dim, 128)
    Np = _round_up(latent_dim, 128)
    wdt = jnp.dtype(compute_dtype) if compute_dtype is not None else jnp.asarray(w_mu).dtype

    def prep_w(w):
        wt = jnp.asarray(w).astype(wdt).T  # (in_dim, latent_dim)
        return jnp.pad(wt, ((0, Kp - in_dim), (0, Np - latent_dim)))

    def prep_b(b):
        b2 = jnp.asarray(b).astype(jnp.float32).reshape(1, latent_dim)
        return jnp.pad(b2, ((0, 0), (0, Np - latent_dim)))

    w_packed = jnp.concatenate([prep_w(w_mu), prep_w(w_lv)], axis=1)  # (Kp, 2*Np)
    b_packed = jnp.concatenate([prep_b(b_mu), prep_b(b_lv)], axis=1)  # (1, 2*Np)
    return w_packed, b_packed


@functools.partial(jax.jit, static_argnames=("latent_dim",))
def duplex_neck_forward(x, w_packed, b_packed, *, latent_dim):
    """Fused SimpleDuplexLinearNeck forward.

    x:        [..., in_dim]
    w_packed: (Kp, 2*Np)  from prepare_duplex_neck_params
    b_packed: (1, 2*Np)
    returns (mu, log_var), each [..., latent_dim], in x.dtype.
    """
    out_dtype = x.dtype
    lead_shape = x.shape[:-1]
    in_dim = x.shape[-1]
    Kp, Nc = w_packed.shape
    Np = Nc // 2

    cdt = w_packed.dtype  # MXU compute dtype (f32 or bf16)
    x2 = jnp.reshape(x, (-1, in_dim)).astype(cdt)
    M = x2.shape[0]

    tm_, tk_, vmem_limit = _plan_tiles(
        M, Kp, Np, Nc,
        jnp.dtype(cdt).itemsize, jnp.dtype(cdt).itemsize,
        jnp.dtype(out_dtype).itemsize)
    Mp = _round_up(max(M, 1), tm_)

    if (Mp, Kp) != (M, in_dim):
        x2 = jnp.pad(x2, ((0, Mp - M), (0, Kp - in_dim)))

    grid = (Mp // tm_, Kp // tk_)

    mu_p, lv_p = pl.pallas_call(
        functools.partial(_duplex_neck_kernel, Np),
        out_shape=(jax.ShapeDtypeStruct((Mp, Np), out_dtype),
                   jax.ShapeDtypeStruct((Mp, Np), out_dtype)),
        grid_spec=pltpu.PrefetchScalarGridSpec(
            num_scalar_prefetch=0,
            grid=grid,
            in_specs=[
                pl.BlockSpec((tm_, tk_), lambda i, k: (i, k)),  # x tile
                pl.BlockSpec((tk_, Nc), lambda i, k: (k, 0)),   # [Wmu^T | Wlv^T]
                pl.BlockSpec((1, Nc), lambda i, k: (0, 0)),     # [b_mu | b_lv]
            ],
            out_specs=[
                pl.BlockSpec((tm_, Np), lambda i, k: (i, 0)),   # mu
                pl.BlockSpec((tm_, Np), lambda i, k: (i, 0)),   # log_var
            ],
            scratch_shapes=[pltpu.VMEM((tm_, Nc), jnp.float32)],
        ),
        compiler_params=pltpu.CompilerParams(
            dimension_semantics=("parallel", "arbitrary"),
            vmem_limit_bytes=vmem_limit,
        ),
    )(x2, w_packed, b_packed)

    mu = jnp.reshape(mu_p[:M, :latent_dim], (*lead_shape, latent_dim))
    lv = jnp.reshape(lv_p[:M, :latent_dim], (*lead_shape, latent_dim))
    return mu, lv


def duplex_linear_neck(x, w_mu, b_mu, w_lv, b_lv, compute_dtype=None):
    """Convenience one-shot wrapper.  Prefer calling prepare_duplex_neck_params
    once and reusing the packed params across forwards."""
    w_packed, b_packed = prepare_duplex_neck_params(w_mu, b_mu, w_lv, b_lv,
                                                    compute_dtype)
    return duplex_neck_forward(x, w_packed, b_packed,
                               latent_dim=int(w_mu.shape[0]))


if __name__ == "__main__":
    key = jax.random.PRNGKey(0)
    k1, k2, k3, k4, k5 = jax.random.split(key, 5)

    batch, seq, in_dim, latent_dim = 2, 8, 32, 16
    x = jax.random.normal(k1, (batch, seq, in_dim), dtype=jnp.float32)

    bound = 1.0 / (in_dim ** 0.5)
    w_mu = jax.random.uniform(k2, (latent_dim, in_dim), jnp.float32, -bound, bound)
    b_mu = jax.random.uniform(k3, (latent_dim,), jnp.float32, -bound, bound)
    w_lv = jax.random.uniform(k4, (latent_dim, in_dim), jnp.float32, -bound, bound)
    b_lv = jax.random.uniform(k5, (latent_dim,), jnp.float32, -bound, bound)

    # Hoisted parameter preparation (done once), f32 MXU path.
    w_packed, b_packed = prepare_duplex_neck_params(w_mu, b_mu, w_lv, b_lv)
    mu, log_var = duplex_neck_forward(x, w_packed, b_packed,
                                      latent_dim=latent_dim)
    jax.block_until_ready((mu, log_var))

    # Plain-JAX reference (PyTorch nn.Linear semantics).
    ref_mu = x @ w_mu.T + b_mu
    ref_lv = x @ w_lv.T + b_lv

    assert mu.shape == (batch, seq, latent_dim)
    assert log_var.shape == (batch, seq, latent_dim)
    assert mu.dtype == x.dtype and log_var.dtype == x.dtype
    assert jnp.max(jnp.abs(mu - ref_mu)) < 1e-5
    assert jnp.max(jnp.abs(log_var - ref_lv)) < 1e-5

    # Optional bf16-MXU path (f32 accumulation), looser tolerance.
    w_bf16, b_bf16 = prepare_duplex_neck_params(
        w_mu, b_mu, w_lv, b_lv, compute_dtype=jnp.bfloat16)
    mu_b, lv_b = duplex_neck_forward(x, w_bf16, b_bf16, latent_dim=latent_dim)
    jax.block_until_ready((mu_b, lv_b))
    assert jnp.max(jnp.abs(mu_b - ref_mu)) < 5e-2
    assert jnp.max(jnp.abs(lv_b - ref_lv)) < 5e-2

    print("KERNEL_OK")
</pallas_src>

<mosaic_0001>
module attributes {stable_mosaic.version = 11 : i64} {
  func.func @_duplex_neck_kernel(%arg0: i32, %arg1: i32, %arg2: memref<8x128xf32, #tpu.memory_space<vmem>>, %arg3: memref<128x256xf32, #tpu.memory_space<vmem>>, %arg4: memref<1x256xf32, #tpu.memory_space<vmem>>, %arg5: memref<8x128xf32, #tpu.memory_space<vmem>>, %arg6: memref<8x128xf32, #tpu.memory_space<vmem>>, %arg7: memref<8x256xf32, #tpu.memory_space<vmem>>) attributes {dimension_semantics = [#tpu.dimension_semantics<parallel>, #tpu.dimension_semantics<arbitrary>], iteration_bounds = array<i64: 2, 1>, scalar_prefetch = 0 : i64, scratch_operands = 1 : i64, tpu.core_type = #tpu.core_type<tc>, window_params = [{transform_indices = @transform_0, window_bounds = array<i64: 8, 128>}, {transform_indices = @transform_1, window_bounds = array<i64: 128, 256>}, {pipeline_mode = #tpu.pipeline_mode<synchronous>, transform_indices = @transform_2, window_bounds = array<i64: 1, 256>}, {transform_indices = @transform_3, window_bounds = array<i64: 8, 128>}, {transform_indices = @transform_4, window_bounds = array<i64: 8, 128>}]} {
    %c0_i32 = arith.constant 0 : i32
    %0 = arith.cmpi eq, %arg1, %c0_i32 : i32
    %1 = arith.extui %0 : i1 to i32
    %c0_i32_0 = arith.constant 0 : i32
    %2 = arith.cmpi ne, %1, %c0_i32_0 : i32
    scf.if %2 {
      %c0_10 = arith.constant 0 : index
      %c0_11 = arith.constant 0 : index
      %12 = vector.load %arg4[%c0_10, %c0_11] : memref<1x256xf32, #tpu.memory_space<vmem>>, vector<1x256xf32>
      %13 = vector.shape_cast %12 : vector<1x256xf32> to vector<1x256xf32>
      %14 = vector.broadcast %13 : vector<1x256xf32> to vector<8x256xf32>
      %c0_12 = arith.constant 0 : index
      %c0_13 = arith.constant 0 : index
      %15 = vector.load %arg7[%c0_12, %c0_13] : memref<8x256xf32, #tpu.memory_space<vmem>>, vector<8x256xf32>
      tpu.vector_store %arg7[%c0_12, %c0_13], %14 {strides = array<i32>} : memref<8x256xf32, #tpu.memory_space<vmem>>, vector<8x256xf32>,
    } else {
    }
    %c0 = arith.constant 0 : index
    %c0_1 = arith.constant 0 : index
    %3 = vector.load %arg7[%c0, %c0_1] : memref<8x256xf32, #tpu.memory_space<vmem>>, vector<8x256xf32>
    %c0_2 = arith.constant 0 : index
    %c0_3 = arith.constant 0 : index
    %4 = vector.load %arg2[%c0_2, %c0_3] : memref<8x128xf32, #tpu.memory_space<vmem>>, vector<8x128xf32>
    %c0_4 = arith.constant 0 : index
    %c0_5 = arith.constant 0 : index
    %5 = vector.load %arg3[%c0_4, %c0_5] : memref<128x256xf32, #tpu.memory_space<vmem>>, vector<128x256xf32>
    %cst = arith.constant dense<0.000000e+00> : vector<8x256xf32>
    %6 = tpu.matmul %4, %5, %cst {dimension_numbers = #tpu.dot_dimension_numbers<[1], [0], [0], [1], [0, 0, 1, 1], [], []>} : vector<8x128xf32>, vector<128x256xf32>, vector<8x256xf32> -> vector<8x256xf32>
    %7 = arith.addf %3, %6 : vector<8x256xf32>
    %c0_6 = arith.constant 0 : index
    %c0_7 = arith.constant 0 : index
    %8 = vector.load %arg7[%c0_6, %c0_7] : memref<8x256xf32, #tpu.memory_space<vmem>>, vector<8x256xf32>
    tpu.vector_store %arg7[%c0_6, %c0_7], %7 {strides = array<i32>} : memref<8x256xf32, #tpu.memory_space<vmem>>, vector<8x256xf32>,
    %c0_i32_8 = arith.constant 0 : i32
    %9 = arith.cmpi eq, %arg1, %c0_i32_8 : i32
    %10 = arith.extui %9 : i1 to i32
    %c0_i32_9 = arith.constant 0 : i32
    %11 = arith.cmpi ne, %10, %c0_i32_9 : i32
    scf.if %11 {
      %c0_10 = arith.constant 0 : index
      %c0_11 = arith.constant 0 : index
      %12 = vector.load %arg7[%c0_10, %c0_11] : memref<8x256xf32, #tpu.memory_space<vmem>>, vector<8x256xf32>
      %13 = vector.extract_strided_slice %12 {offsets = [0, 0], sizes = [8, 128], strides = [1, 1]} : vector<8x256xf32> to vector<8x128xf32>
      %c0_12 = arith.constant 0 : index
      %c0_13 = arith.constant 0 : index
      %14 = vector.load %arg5[%c0_12, %c0_13] : memref<8x128xf32, #tpu.memory_space<vmem>>, vector<8x128xf32>
      tpu.vector_store %arg5[%c0_12, %c0_13], %13 {strides = array<i32>} : memref<8x128xf32, #tpu.memory_space<vmem>>, vector<8x128xf32>,
      %15 = vector.extract_strided_slice %12 {offsets = [0, 128], sizes = [8, 128], strides = [1, 1]} : vector<8x256xf32> to vector<8x128xf32>
      %c0_14 = arith.constant 0 : index
      %c0_15 = arith.constant 0 : index
      %16 = vector.load %arg6[%c0_14, %c0_15] : memref<8x128xf32, #tpu.memory_space<vmem>>, vector<8x128xf32>
      tpu.vector_store %arg6[%c0_14, %c0_15], %15 {strides = array<i32>} : memref<8x128xf32, #tpu.memory_space<vmem>>, vector<8x128xf32>,
    } else {
    }
    return
  }
  func.func @transform_0(%arg0: i32, %arg1: i32) -> (i32, i32) {
    %c0_i32 = arith.constant 0 : i32
    return %arg0, %arg1 : i32, i32
  }
  func.func @transform_1(%arg0: i32, %arg1: i32) -> (i32, i32) {
    %c0_i32 = arith.constant 0 : i32
    %c0_i32_0 = arith.constant 0 : i32
    return %arg1, %c0_i32 : i32, i32
  }
  func.func @transform_2(%arg0: i32, %arg1: i32) -> (i32, i32) {
    %c0_i32 = arith.constant 0 : i32
    %c0_i32_0 = arith.constant 0 : i32
    %c0_i32_1 = arith.constant 0 : i32
    return %c0_i32, %c0_i32_0 : i32, i32
  }
  func.func @transform_3(%arg0: i32, %arg1: i32) -> (i32, i32) {
    %c0_i32 = arith.constant 0 : i32
    %c0_i32_0 = arith.constant 0 : i32
    return %arg0, %c0_i32 : i32, i32
  }
  func.func @transform_4(%arg0: i32, %arg1: i32) -> (i32, i32) {
    %c0_i32 = arith.constant 0 : i32
    %c0_i32_0 = arith.constant 0 : i32
    return %arg0, %c0_i32 : i32, i32
  }
}

</mosaic_0001>

<llo_original>
// kernel: duplex_neck_forward.1
$region0: #{duplex_neck_forward.1}
  #allocation0 [shape = 'u32[]', space=smem, size = 0x4, offset = 0x4, fixed_abs, tag = 'smem constant byte address 0x4 - core index']
  #allocation1 [shape = 'u32[72,128]{1,0:T(1,128)}', space=vmem, size = 0x9000, scoped, tag = 'internal scratch']
  #allocation2 [shape = 'f32[8,256]{1,0:T(8,128)}', space=vmem, size = 0x2000, scoped, tag = 'scratch operand']
  %s0 = inlined_call_operand.vmem [shape: f32[16,128], index: 0, kind: input, shape index: {}]
  %s1 = inlined_call_operand.hbm [shape: f32[128,256], index: 1, kind: input, shape index: {}]
  %s2 = inlined_call_operand.vmem [shape: f32[1,256], index: 2, kind: input, shape index: {}]
  %s3 = inlined_call_operand.vmem [shape: f32[16,128], index: 3, kind: output, shape index: {0}]
  %s4 = inlined_call_operand.vmem [shape: f32[16,128], index: 4, kind: output, shape index: {1}]
  %5 = xla_tuple %s3, %s4
  %s6 = sld [smem:[#allocation0]]
  $region65: #{duplex_neck_forward.1} parent=0
    _
  %s8 = ssub.s32 1, %s6
  %s9 = scalar_select 0, %s8, %s6
  $region1: #{duplex_neck_forward.1} parent=0
    #allocation3 [shape = 'u8[131072]{0}', space=vmem, size = 0x20000, scoped, tag = 'input window, operand 1, single buffered']
    #allocation4 [shape = 's32[2]{0}', space=sflag, size = 0x8, scoped, tag = 'scoped memory for duplex_neck_forward.1']
    %10 = vsyncpa [#allocation4], 0
    loop: start=0, step=1, limit=4
    $region2: #{duplex_neck_forward.1} parent=1 // loop_pre_header
      _
    $region3: #{duplex_neck_forward.1} parent=1 // loop_header
      %s12 = sphi 0, %s16
      %p13 = scmp.ge.s32.totalorder %s12, 4
      %s19 = sphi 0, %s31
      %s20 = sphi 0, %s27
      %s21 = sphi 0, %s19
      %s22 = sphi 0, %s20
      %s23 = sphi 0, %s21
      %s24 = sphi 0, %s22
      %s36 = sphi 0, %s38
      %s39 = sphi 0, %s36
      %s40 = sphi 0, %s39
      %s56 = sphi 0, %s40
      %s62 = sphi 0, %s64
      %s65 = sphi 0, %s62
      %s66 = sphi 0, %s65
      %s82 = sphi 0, %s66
      %s86 = sphi 0, %s86
      %s88 = sphi 0, %s86
      %s89 = sphi 0, %s88
      %s103 = sphi 0, %s89
      %s109 = sphi 0, %s111
      %s112 = sphi 0, %s109
      %s113 = sphi 0, %s112
      %s129 = sphi 0, %s113
      %s135 = sphi 0, %s137
      %s138 = sphi 0, %s135
      %s139 = sphi 0, %s138
      %s155 = sphi 0, %s139
    $region4: #{duplex_neck_forward.1} parent=1 // loop_header_branch
      %15 = sbr.rel (%p13) target = $region8
    $region5: #{duplex_neck_forward.1} parent=1 // loop_body
      %s17 = ssub.s32 %s12, 1
      %s18 = ssub.s32 %s12, 2
      %s25 = sadd.s32 1, %s20
      %p26 = scmp.ge.s32.totalorder %s25, 1
      %s27 = scalar_select %p26, 0, %s25
      %s28 = sadd.s32 1, %s19
      %s29 = scalar_select %p26, %s28, %s19
      %p30 = scmp.ge.s32.totalorder %s29, 2
      %s31 = scalar_select %p30, 0, %s29
      %s32 = ssub.s32 %s19, %s31
      %s33 = ssub.s32 %s20, %s27
      %s34 = sor.u32 %s32, %s33
      %p35 = scmp.eq.s32.totalorder %s34, 0
      %s37 = sadd.s32 %s36, 1
      %s38 = scalar_select %p35, %s36, %s37
      %p41 = pneg %p35
      %p42 = scmp.eq.s32.totalorder %s12, 1
      %p43 = por %p41, %p42
      %p44 = scmp.ne.s32.totalorder %s36, %s39
      %p45 = scmp.eq.s32.totalorder %s12, 0
      %p46 = por %p44, %p45
      %p47 = scmp.ne.s32.totalorder %s36, %s39
      %p48 = scmp.eq.s32.totalorder %s17, 1
      %p49 = por %p47, %p48
      %p50 = scmp.ne.s32.totalorder %s39, %s40
      %p51 = scmp.eq.s32.totalorder %s17, 0
      %p52 = por %p50, %p51
      %p53 = scmp.ne.s32.totalorder %s39, %s40
      %p54 = scmp.eq.s32.totalorder %s18, 1
      %p55 = por %p53, %p54
      %p57 = scmp.ne.s32.totalorder %s40, %s56
      %p58 = scmp.eq.s32.totalorder %s18, 0
      %p59 = por %p57, %p58
      %s60 = ssub.s32 %s20, %s27
      %p61 = scmp.eq.s32.totalorder %s60, 0
      %s63 = sadd.s32 %s62, 1
      %s64 = scalar_select %p61, %s62, %s63
      %p67 = pneg %p61
      %p68 = scmp.eq.s32.totalorder %s12, 1
      %p69 = por %p67, %p68
      %p70 = scmp.ne.s32.totalorder %s62, %s65
      %p71 = scmp.eq.s32.totalorder %s12, 0
      %p72 = por %p70, %p71
      %p73 = scmp.ne.s32.totalorder %s62, %s65
      %p74 = scmp.eq.s32.totalorder %s17, 1
      %p75 = por %p73, %p74
      %p76 = scmp.ne.s32.totalorder %s65, %s66
      %p77 = scmp.eq.s32.totalorder %s17, 0
      %p78 = por %p76, %p77
      %p79 = scmp.ne.s32.totalorder %s65, %s66
      %p80 = scmp.eq.s32.totalorder %s18, 1
      %p81 = por %p79, %p80
      %p83 = scmp.ne.s32.totalorder %s66, %s82
      %p84 = scmp.eq.s32.totalorder %s18, 0
      %p85 = por %p83, %p84
      %s87 = sadd.s32 %s86, 1
      %p90 = scmp.eq.s32.totalorder %s12, 1
      %p91 = scmp.ne.s32.totalorder %s86, %s88
      %p92 = scmp.eq.s32.totalorder %s12, 0
      %p93 = por %p91, %p92
      %p94 = scmp.ne.s32.totalorder %s86, %s88
      %p95 = scmp.eq.s32.totalorder %s17, 1
      %p96 = por %p94, %p95
      %p97 = scmp.ne.s32.totalorder %s88, %s89
      %p98 = scmp.eq.s32.totalorder %s17, 0
      %p99 = por %p97, %p98
      %p100 = scmp.ne.s32.totalorder %s88, %s89
      %p101 = scmp.eq.s32.totalorder %s18, 1
      %p102 = por %p100, %p101
      %p104 = scmp.ne.s32.totalorder %s89, %s103
      %p105 = scmp.eq.s32.totalorder %s18, 0
      %p106 = por %p104, %p105
      %s107 = ssub.s32 %s19, %s31
      %p108 = scmp.eq.s32.totalorder %s107, 0
      %s110 = sadd.s32 %s109, 1
      %s111 = scalar_select %p108, %s109, %s110
      %p114 = pneg %p108
      %p115 = scmp.eq.s32.totalorder %s12, 1
      %p116 = por %p114, %p115
      %p117 = scmp.ne.s32.totalorder %s109, %s112
      %p118 = scmp.eq.s32.totalorder %s12, 0
      %p119 = por %p117, %p118
      %p120 = scmp.ne.s32.totalorder %s109, %s112
      %p121 = scmp.eq.s32.totalorder %s17, 1
      %p122 = por %p120, %p121
      %p123 = scmp.ne.s32.totalorder %s112, %s113
      %p124 = scmp.eq.s32.totalorder %s17, 0
      %p125 = por %p123, %p124
      %p126 = scmp.ne.s32.totalorder %s112, %s113
      %p127 = scmp.eq.s32.totalorder %s18, 1
      %p128 = por %p126, %p127
      %p130 = scmp.ne.s32.totalorder %s113, %s129
      %p131 = scmp.eq.s32.totalorder %s18, 0
      %p132 = por %p130, %p131
      %s133 = ssub.s32 %s19, %s31
      %p134 = scmp.eq.s32.totalorder %s133, 0
      %s136 = sadd.s32 %s135, 1
      %s137 = scalar_select %p134, %s135, %s136
      %p140 = pneg %p134
      %p141 = scmp.eq.s32.totalorder %s12, 1
      %p142 = por %p140, %p141
      %p143 = scmp.ne.s32.totalorder %s135, %s138
      %p144 = scmp.eq.s32.totalorder %s12, 0
      %p145 = por %p143, %p144
      %p146 = scmp.ne.s32.totalorder %s135, %s138
      %p147 = scmp.eq.s32.totalorder %s17, 1
      %p148 = por %p146, %p147
      %p149 = scmp.ne.s32.totalorder %s138, %s139
      %p150 = scmp.eq.s32.totalorder %s17, 0
      %p151 = por %p149, %p150
      %p152 = scmp.ne.s32.totalorder %s138, %s139
      %p153 = scmp.eq.s32.totalorder %s18, 1
      %p154 = por %p152, %p153
      %p156 = scmp.ne.s32.totalorder %s139, %s155
      %p157 = scmp.eq.s32.totalorder %s18, 0
      %p158 = por %p156, %p157
      %p159 = scmp.le.s32.totalorder 1, %s12
      %p160 = scmp.lt.s32.totalorder %s12, 3
      %p161 = pnand %p159, %p160
      %p162 = pneg %p161
      // Predicated region
      $region9: #{duplex_neck_forward.1} parent=5 // pred_check
        _
      $region10: #{duplex_neck_forward.1} parent=5 // pred_check_branch
        %164 = sbr.rel (%p161) target = $region12
      $region11: #{duplex_neck_forward.1} parent=5 // pred_region
        %s165 = ssub.s32 %s12, 1
        // Predicated region
        $region13: #{duplex_neck_forward.1} parent=11 // pred_check
          %p166 = pneg %p78
        $region14: #{duplex_neck_forward.1} parent=11 // pred_check_branch
          %168 = sbr.rel (%p166) target = $region16
        $region15: #{duplex_neck_forward.1} parent=11 // pred_region
          %s169 = smul.u32 16, %s22
          %171 = vsyncadd [#allocation4], 0
          %s172 = smul.addr %s169, 2
          %s173 = smul.addr %s172, 8
          %s174 = scalar_lea.hbm %s1, %s173
          %s175 = sshll.u32 %s174, 4
          %s176 = int_to_ptr.hbm [resolvable:$true] %s175
          %s177 = sshll.u32 [#allocation3], 4
          %s178 = int_to_ptr.vmem [resolvable:$true] %s177
          %183 = dma.hbm_to_vmem [thread:$0]  %s176, 4096, %s178, [#allocation4], 256, 256, 16
        $region16: #{duplex_neck_forward.1} parent=11 // pred_fallthru
          _
        // Predicated region
        $region17: #{duplex_neck_forward.1} parent=11 // pred_check
          %p184 = pneg %p99
        $region18: #{duplex_neck_forward.1} parent=11 // pred_check_branch
          %186 = sbr.rel (%p184) target = $region20
        $region19: #{duplex_neck_forward.1} parent=11 // pred_region
          _
        $region20: #{duplex_neck_forward.1} parent=11 // pred_fallthru
          _
      $region12: #{duplex_neck_forward.1} parent=5 // pred_fallthru
        _
      %p187 = scmp.lt.s32.totalorder %s12, 2
      // Predicated region
      $region21: #{duplex_neck_forward.1} parent=5 // pred_check
        %p188 = pneg %p187
      $region22: #{duplex_neck_forward.1} parent=5 // pred_check_branch
        %190 = sbr.rel (%p188) target = $region24
      $region23: #{duplex_neck_forward.1} parent=5 // pred_region
        // Predicated region
        $region25: #{duplex_neck_forward.1} parent=23 // pred_check
          %p191 = pneg %p46
        $region26: #{duplex_neck_forward.1} parent=23 // pred_check_branch
          %193 = sbr.rel (%p191) target = $region28
        $region27: #{duplex_neck_forward.1} parent=23 // pred_region
          %p194 = scmp.lt.s32.totalorder %s19, 1
          %s195 = scalar_select %p194, %s19, 1
          %p196 = scmp.lt.s32.totalorder %s20, 0
          %s197 = scalar_select %p196, %s20, 0
          %s198 = sadd.s32 %s197, %s195
          %s199 = smul.addr %s198, 8
          %s200 = scalar_lea.vmem %s0, %s199
        $region28: #{duplex_neck_forward.1} parent=23 // pred_fallthru
          _
      $region24: #{duplex_neck_forward.1} parent=5 // pred_fallthru
        _
      %p201 = scmp.le.s32.totalorder 1, %s12
      %p202 = scmp.lt.s32.totalorder %s12, 3
      %p203 = pnand %p201, %p202
      %p204 = pneg %p203
      // Predicated region
      $region29: #{duplex_neck_forward.1} parent=5 // pred_check
        _
      $region30: #{duplex_neck_forward.1} parent=5 // pred_check_branch
        %206 = sbr.rel (%p203) target = $region32
      $region31: #{duplex_neck_forward.1} parent=5 // pred_region
        %s207 = ssub.s32 %s12, 1
        // Predicated region
        $region33: #{duplex_neck_forward.1} parent=31 // pred_check
          %p208 = pneg %p78
        $region34: #{duplex_neck_forward.1} parent=31 // pred_check_branch
          %210 = sbr.rel (%p208) target = $region36
        $region35: #{duplex_neck_forward.1} parent=31 // pred_region
          %212 = dma.done [#allocation4], 4096
        $region36: #{duplex_neck_forward.1} parent=31 // pred_fallthru
          _
        %p213 = scmp.lt.s32.totalorder %s21, 1
        %s214 = scalar_select %p213, %s21, 1
        %p215 = scmp.lt.s32.totalorder %s22, 0
        %s216 = scalar_select %p215, %s22, 0
        %s217 = sadd.s32 %s216, %s214
        %s218 = smul.addr %s217, 8
        %s219 = scalar_lea.vmem %s0, %s218
        %p220 = pneg %p52
        %p221 = pneg %p49
        %p222 = pneg %p78
        %p223 = pneg %p75
        %p224 = pneg %p99
        %p225 = pneg %p96
        %p226 = pneg %p125
        %p227 = pneg %p122
        %p228 = scmp.lt.s32.totalorder %s21, 1
        %s229 = scalar_select %p228, %s21, 1
        %s230 = smul.addr %s229, 8
        %s231 = scalar_lea.vmem %s3, %s230
        %p232 = pneg %p151
        %p233 = pneg %p148
        %p234 = scmp.lt.s32.totalorder %s21, 1
        %s235 = scalar_select %p234, %s21, 1
        %s236 = smul.addr %s235, 8
        %s237 = scalar_lea.vmem %s4, %s236
        %p238 = scmp.lt.s32.totalorder %s21, 1
        %s239 = scalar_select %p238, %s21, 1
        %p240 = scmp.lt.s32.totalorder %s22, 0
        %s241 = scalar_select %p240, %s22, 0
        %s242 = sadd.s32 %s241, %s239
        %s243 = smul.addr %s242, 8
        %s244 = scalar_lea.vmem %s0, %s243
        %s245 = smul.u32 16, %s22
        %p246 = scmp.lt.s32.totalorder %s21, 1
        %s247 = scalar_select %p246, %s21, 1
        %s248 = smul.addr %s247, 8
        %s249 = scalar_lea.vmem %s3, %s248
        %p250 = scmp.lt.s32.totalorder %s21, 1
        %s251 = scalar_select %p250, %s21, 1
        %s252 = smul.addr %s251, 8
        %s253 = scalar_lea.vmem %s4, %s252
        %p254 = scmp.eq.s32.totalorder %s22, 0
        // Predicated region
        $region37: #{duplex_neck_forward.1} parent=31 // pred_check
          %p255 = pneg %p254
        $region38: #{duplex_neck_forward.1} parent=31 // pred_check_branch
          %257 = sbr.rel (%p255) target = $region40
        $region39: #{duplex_neck_forward.1} parent=31 // pred_region
          %v258 = vld [vmem:[%s2] sm:$0x3]
          %v260 = vperm.slane %v258, 0
          %v261 = vperm.slane %v258, 1
          %264 = vst [vmem:[#allocation2] sm:$0xff] %v260
          %265 = vst [vmem:[#allocation2 + $0x8] sm:$0xff] %v261
        $region40: #{duplex_neck_forward.1} parent=31 // pred_fallthru
          _
        %v266 = vld [vmem:[#allocation2] sm:$0xff]
        %v267 = vld [vmem:[#allocation2 + $0x8] sm:$0xff]
        %v268 = vld [vmem:[%s244] sm:$0xff]
        %v269 = vld [vmem:[#allocation3] sm:$0xff]
        %v270 = vld [vmem:[#allocation3 + $0x8] sm:$0xff]
        %v271 = vld [vmem:[#allocation3 + $0x10] sm:$0xff]
        %v272 = vld [vmem:[#allocation3 + $0x18] sm:$0xff]
        %v273 = vld [vmem:[#allocation3 + $0x20] sm:$0xff]
        %v274 = vld [vmem:[#allocation3 + $0x28] sm:$0xff]
        %v275 = vld [vmem:[#allocation3 + $0x30] sm:$0xff]
        %v276 = vld [vmem:[#allocation3 + $0x38] sm:$0xff]
        %v277 = vld [vmem:[#allocation3 + $0x40] sm:$0xff]
        %v278 = vld [vmem:[#allocation3 + $0x48] sm:$0xff]
        %v279 = vld [vmem:[#allocation3 + $0x50] sm:$0xff]
        %v280 = vld [vmem:[#allocation3 + $0x58] sm:$0xff]
        %v281 = vld [vmem:[#allocation3 + $0x60] sm:$0xff]
        %v282 = vld [vmem:[#allocation3 + $0x68] sm:$0xff]
        %v283 = vld [vmem:[#allocation3 + $0x70] sm:$0xff]
        %v284 = vld [vmem:[#allocation3 + $0x78] sm:$0xff]
        %v285 = vld [vmem:[#allocation3 + $0x80] sm:$0xff]
        %v286 = vld [vmem:[#allocation3 + $0x88] sm:$0xff]
        %v287 = vld [vmem:[#allocation3 + $0x90] sm:$0xff]
        %v288 = vld [vmem:[#allocation3 + $0x98] sm:$0xff]
        %v289 = vld [vmem:[#allocation3 + $0xa0] sm:$0xff]
        %v290 = vld [vmem:[#allocation3 + $0xa8] sm:$0xff]
        %v291 = vld [vmem:[#allocation3 + $0xb0] sm:$0xff]
        %v292 = vld [vmem:[#allocation3 + $0xb8] sm:$0xff]
        %v293 = vld [vmem:[#allocation3 + $0xc0] sm:$0xff]
        %v294 = vld [vmem:[#allocation3 + $0xc8] sm:$0xff]
        %v295 = vld [vmem:[#allocation3 + $0xd0] sm:$0xff]
        %v296 = vld [vmem:[#allocation3 + $0xd8] sm:$0xff]
        %v297 = vld [vmem:[#allocation3 + $0xe0] sm:$0xff]
        %v298 = vld [vmem:[#allocation3 + $0xe8] sm:$0xff]
        %v299 = vld [vmem:[#allocation3 + $0xf0] sm:$0xff]
        %v300 = vld [vmem:[#allocation3 + $0xf8] sm:$0xff]
        %301 = vmatpush.msra.mxu0 %v299
        %302 = vmatpush.msra.mxu0 %v297
        %303 = vmatpush.msra.mxu0 %v295
        %304 = vmatpush.msra.mxu0 %v293
        %305 = vmatpush.msra.mxu0 %v291
        %306 = vmatpush.msra.mxu0 %v289
        %307 = vmatpush.msra.mxu0 %v287
        %308 = vmatpush.msra.mxu0 %v285
        %309 = vmatpush.msra.mxu0 %v283
        %310 = vmatpush.msra.mxu0 %v281
        %311 = vmatpush.msra.mxu0 %v279
        %312 = vmatpush.msra.mxu0 %v277
        %313 = vmatpush.msra.mxu0 %v275
        %314 = vmatpush.msra.mxu0 %v273
        %315 = vmatpush.msra.mxu0 %v271
        %316 = vmatpush.msra.mxu0 %v269
        %317 = vmatmul.f32.gmra.mxu0 %v268
        %v318 = vpop.f32.mrf.mxu0
        %v319 = vadd.f32 0.0, %v318
        %320 = vdwg.mxu0
        %321 = vmatpush.msra.mxu0 %v300
        %322 = vmatpush.msra.mxu0 %v298
        %323 = vmatpush.msra.mxu0 %v296
        %324 = vmatpush.msra.mxu0 %v294
        %325 = vmatpush.msra.mxu0 %v292
        %326 = vmatpush.msra.mxu0 %v290
        %327 = vmatpush.msra.mxu0 %v288
        %328 = vmatpush.msra.mxu0 %v286
        %329 = vmatpush.msra.mxu0 %v284
        %330 = vmatpush.msra.mxu0 %v282
        %331 = vmatpush.msra.mxu0 %v280
        %332 = vmatpush.msra.mxu0 %v278
        %333 = vmatpush.msra.mxu0 %v276
        %334 = vmatpush.msra.mxu0 %v274
        %335 = vmatpush.msra.mxu0 %v272
        %336 = vmatpush.msra.mxu0 %v270
        %337 = vmatmul.f32.gmra.mxu0 %v268
        %v338 = vpop.f32.mrf.mxu0
        %v339 = vadd.f32 0.0, %v338
        %340 = vdwg.mxu0
        %v341 = vadd.f32 %v266, %v319
        %v342 = vadd.f32 %v267, %v339
        %343 = vst [vmem:[#allocation2] sm:$0xff] %v341
        %344 = vst [vmem:[#allocation2 + $0x8] sm:$0xff] %v342
        // Predicated region
        $region41: #{duplex_neck_forward.1} parent=31 // pred_check
          %p345 = pneg %p254
        $region42: #{duplex_neck_forward.1} parent=31 // pred_check_branch
          %347 = sbr.rel (%p345) target = $region44
        $region43: #{duplex_neck_forward.1} parent=31 // pred_region
          %v348 = vld [vmem:[#allocation2] sm:$0xff]
          %v349 = vld [vmem:[#allocation2 + $0x8] sm:$0xff]
          %350 = vst [vmem:[%s249] sm:$0xff] %v348
          %351 = vst [vmem:[%s253] sm:$0xff] %v349
        $region44: #{duplex_neck_forward.1} parent=31 // pred_fallthru
          _
        %p352 = scmp.lt.s32.totalorder %s21, 1
        %s353 = scalar_select %p352, %s21, 1
        %s354 = smul.addr %s353, 8
        %s355 = scalar_lea.vmem %s3, %s354
        %p356 = scmp.lt.s32.totalorder %s21, 1
        %s357 = scalar_select %p356, %s21, 1
        %s358 = smul.addr %s357, 8
        %s359 = scalar_lea.vmem %s4, %s358
        // Predicated region
        $region45: #{duplex_neck_forward.1} parent=31 // pred_check
          %p360 = pneg %p122
        $region46: #{duplex_neck_forward.1} parent=31 // pred_check_branch
          %362 = sbr.rel (%p360) target = $region48
        $region47: #{duplex_neck_forward.1} parent=31 // pred_region
          _
        $region48: #{duplex_neck_forward.1} parent=31 // pred_fallthru
          _
        // Predicated region
        $region49: #{duplex_neck_forward.1} parent=31 // pred_check
          %p363 = pneg %p148
        $region50: #{duplex_neck_forward.1} parent=31 // pred_check_branch
          %365 = sbr.rel (%p363) target = $region52
        $region51: #{duplex_neck_forward.1} parent=31 // pred_region
          _
        $region52: #{duplex_neck_forward.1} parent=31 // pred_fallthru
          _
      $region32: #{duplex_neck_forward.1} parent=5 // pred_fallthru
        _
      %p366 = scmp.le.s32.totalorder 2, %s12
      // Predicated region
      $region53: #{duplex_neck_forward.1} parent=5 // pred_check
        %p367 = pneg %p366
      $region54: #{duplex_neck_forward.1} parent=5 // pred_check_branch
        %369 = sbr.rel (%p367) target = $region56
      $region55: #{duplex_neck_forward.1} parent=5 // pred_region
        %s370 = ssub.s32 %s12, 2
        // Predicated region
        $region57: #{duplex_neck_forward.1} parent=55 // pred_check
          %p371 = pneg %p128
        $region58: #{duplex_neck_forward.1} parent=55 // pred_check_branch
          %373 = sbr.rel (%p371) target = $region60
        $region59: #{duplex_neck_forward.1} parent=55 // pred_region
          %p374 = scmp.lt.s32.totalorder %s23, 1
          %s375 = scalar_select %p374, %s23, 1
          %s376 = smul.addr %s375, 8
          %s377 = scalar_lea.vmem %s3, %s376
        $region60: #{duplex_neck_forward.1} parent=55 // pred_fallthru
          _
        // Predicated region
        $region61: #{duplex_neck_forward.1} parent=55 // pred_check
          %p378 = pneg %p154
        $region62: #{duplex_neck_forward.1} parent=55 // pred_check_branch
          %380 = sbr.rel (%p378) target = $region64
        $region63: #{duplex_neck_forward.1} parent=55 // pred_region
          %p381 = scmp.lt.s32.totalorder %s23, 1
          %s382 = scalar_select %p381, %s23, 1
          %s383 = smul.addr %s382, 8
          %s384 = scalar_lea.vmem %s4, %s383
        $region64: #{duplex_neck_forward.1} parent=55 // pred_fallthru
          _
      $region56: #{duplex_neck_forward.1} parent=5 // pred_fallthru
        _
    $region6: #{duplex_neck_forward.1} parent=1 // loop_footer
      %s16 = sadd.s32 1, %s12
    $region7: #{duplex_neck_forward.1} parent=1 // loop_footer_branch
      %11 = sbr.rel target = $region3
    $region8: #{duplex_neck_forward.1} parent=1 // loop_exit
      _
    %385 = vsyncpa [#allocation4], 1
    %s386 = scalar_lea.sflag [#allocation4], 1
    %387 = vsyncpa %s386, 1

</llo_original>
